<compile_context>
chip_gen: v6e
topology: v6e:2x2x1
jax: 0.10.0
libtpu: 0.0.40
codegen_flags: <defaults>
</compile_context>

<pallas_src>
import functools

import jax
import jax.numpy as jnp
from jax.experimental import pallas as pl
from jax.experimental.pallas import tpu as pltpu


def _round_up(x, m):
    return (x + m - 1) // m * m


def _critic_kernel(xy_ref, w0_ref, w1_ref, w2_ref, w3_ref, b_ref, o_ref):
    """One batch tile of the whole MLP. Weights/biases are VMEM-resident."""
    cdt = w1_ref.dtype                                    # compute dtype (f32 or bf16)

    # --- layer 0: single fused-concat matmul (K = n_states + n_actions) ------
    h = jnp.dot(xy_ref[...], w0_ref[...], preferred_element_type=jnp.float32)
    h = h + b_ref[0:1, :]                                 # b0 (f32 epilogue)
    # (no activation after the input layer — matches the PyTorch module)

    # --- layer 1: relu(h @ w1 + b1) ------------------------------------------
    h = jnp.dot(h.astype(cdt), w1_ref[...], preferred_element_type=jnp.float32)
    h = jnp.maximum(h + b_ref[1:2, :], 0.0)

    # --- layer 2: relu(h @ w2 + b2) ------------------------------------------
    h = jnp.dot(h.astype(cdt), w2_ref[...], preferred_element_type=jnp.float32)
    h = jnp.maximum(h + b_ref[2:3, :], 0.0)

    # --- out layer: (H, 1) matmul -> VPU multiply + lane (XLU) reduction -----
    w3 = w3_ref[...].astype(jnp.float32)                  # (1, Hp), zero-padded
    o_ref[...] = jnp.sum(h * w3, axis=-1, keepdims=True) + b_ref[3:4, 0:1]


def init_linear(key, fan_in, fan_out):
    """Mimics torch.nn.Linear default init (uniform +/- 1/sqrt(fan_in)).
    Weight stored as (fan_in, fan_out); bias as (fan_out,)."""
    kw, kb = jax.random.split(key)
    bound = 1.0 / jnp.sqrt(jnp.float32(fan_in))
    w = jax.random.uniform(kw, (fan_in, fan_out), jnp.float32, -bound, bound)
    b = jax.random.uniform(kb, (fan_out,), jnp.float32, -bound, bound)
    return w, b


def init_params(key, n_states, n_actions, n_hidden):
    k0, k1, k2, k3 = jax.random.split(key, 4)
    return (
        init_linear(k0, n_states + n_actions, n_hidden),  # self.input
        init_linear(k1, n_hidden, n_hidden),              # self.l1
        init_linear(k2, n_hidden, n_hidden),              # self.l2
        init_linear(k3, n_hidden, 1),                     # self.out
    )


def pack_params(params, compute_dtype=jnp.bfloat16):
    """One-time prep.

    * Hidden dim is padded to a multiple of 128 ONLY when H > 128 (full-dim
      blocks are legal, so small H stays un-inflated); padded rows/cols are 0,
      preserving semantics exactly.
    * All biases are packed into one (4, Hp) f32 buffer (single tiny DMA).
    * Weights default to bf16 on every chip (v5e MXU is bf16-native; f32
      accumulation + f32 epilogue are kept in-kernel).
    """
    (w0, b0), (w1, b1), (w2, b2), (w3, b3) = params
    H = w1.shape[0]
    Hp = H if H <= 128 else _round_up(H, 128)
    dH = Hp - H

    w0p = jnp.pad(w0, ((0, 0), (0, dH))).astype(compute_dtype)      # (ns+na, Hp)
    w1p = jnp.pad(w1, ((0, dH), (0, dH))).astype(compute_dtype)     # (Hp, Hp)
    w2p = jnp.pad(w2, ((0, dH), (0, dH))).astype(compute_dtype)     # (Hp, Hp)
    w3r = jnp.pad(w3.reshape(1, H), ((0, 0), (0, dH))).astype(jnp.float32)  # (1, Hp)

    biases = jnp.zeros((4, Hp), jnp.float32)
    biases = biases.at[0, :H].set(b0)
    biases = biases.at[1, :H].set(b1)
    biases = biases.at[2, :H].set(b2)
    biases = biases.at[3, 0].set(b3[0])
    return (w0p, w1p, w2p, w3r, biases)


def _choose_tiles(B, tile_b):
    """Pick (tb, num_tiles): few, balanced, sublane-aligned batch tiles.

    * tile_b is clamped to a multiple of 16 unconditionally (bf16 sublane pack).
    * When there is enough work, the tile count is made even and the tiles
      equal-sized so the "parallel" batch axis splits evenly across the two
      v7x TensorCores (no-op cost on single-TC v5e/v6e: one extra ~0.35us step
      at most).
    """
    tile_b = max(16, _round_up(int(tile_b), 16))
    num_tiles = pl.cdiv(B, tile_b)
    if B > 16:
        if num_tiles == 1:
            num_tiles = 2
        elif num_tiles % 2 == 1:
            num_tiles += 1
    tb = _round_up(pl.cdiv(B, num_tiles), 16)
    num_tiles = pl.cdiv(B, tb)
    return tb, num_tiles


@functools.partial(jax.jit, static_argnames=("tile_b",))
def ddpg_critic_forward(x, y, packed, tile_b=1024):
    """x: (B, n_states), y: (B, n_actions) -> (B, 1) float32."""
    w0, w1, w2, w3, biases = packed
    B = x.shape[0]
    ns_na = w0.shape[0]                     # n_states + n_actions
    Hp = w1.shape[0]
    cdt = w1.dtype
    itemsize = jnp.dtype(cdt).itemsize

    # Fused concat: one (B, ns+na) operand, one K=(ns+na) layer-0 dot.
    xy = jnp.concatenate([x, y], axis=1).astype(cdt)

    tb, num_tiles = _choose_tiles(B, tile_b)
    grid = (num_tiles,)

    def resident(shape):
        # Constant index_map -> block stays in VMEM for the whole grid.
        # Buffered(1): no dead second pipeline buffer for never-changing blocks.
        return pl.BlockSpec(shape, lambda i: (0, 0),
                            pipeline_mode=pl.Buffered(1))

    # --- VMEM budget (weights single-buffered, activations double-buffered,
    # generous allowance for the f32 (tb, Hp) intermediates), clamped to the
    # v7x physical 64 MiB per TC. ---------------------------------------------
    weight_bytes = (ns_na * Hp + 2 * Hp * Hp) * itemsize + Hp * 4 + 4 * Hp * 4
    act_bytes = 2 * tb * ns_na * itemsize + 2 * tb * 4
    scratch_bytes = 4 * tb * Hp * 4
    vmem_est = weight_bytes + act_bytes + scratch_bytes + (4 << 20)
    vmem_limit = int(min(max(vmem_est, 32 << 20), 64 << 20))

    # --- cost hint so XLA overlaps this cheap call with surrounding ops ------
    flops = 2 * B * (ns_na * Hp + 2 * Hp * Hp + Hp)
    bytes_accessed = weight_bytes + B * ns_na * itemsize + B * 4
    cost = pl.CostEstimate(flops=int(flops), transcendentals=0,
                           bytes_accessed=int(bytes_accessed))

    out = pl.pallas_call(
        _critic_kernel,
        out_shape=jax.ShapeDtypeStruct((B, 1), jnp.float32),
        grid=grid,
        in_specs=[
            pl.BlockSpec((tb, ns_na), lambda i: (i, 0)),  # xy tile
            resident((ns_na, Hp)),                        # w0
            resident((Hp, Hp)),                           # w1
            resident((Hp, Hp)),                           # w2
            resident((1, Hp)),                            # w3 row (f32)
            resident((4, Hp)),                            # packed biases (f32)
        ],
        out_specs=pl.BlockSpec((tb, 1), lambda i: (i, 0)),
        compiler_params=pltpu.CompilerParams(
            dimension_semantics=("parallel",),            # v7x: 2 TCs over batch
            vmem_limit_bytes=vmem_limit,
        ),
        cost_estimate=cost,
    )(xy, w0, w1, w2, w3, biases)
    return out


def reference_forward(x, y, params):
    """Pure-JAX reference of the PyTorch forward (correctness check)."""
    (w0, b0), (w1, b1), (w2, b2), (w3, b3) = params
    h = jnp.concatenate([x, y], axis=1)
    h = h @ w0 + b0
    h = jax.nn.relu(h @ w1 + b1)
    h = jax.nn.relu(h @ w2 + b2)
    return h @ w3 + b3


if __name__ == "__main__":
    batch = 2
    n_states = 16
    n_actions = 8
    n_hidden = 32

    key = jax.random.PRNGKey(0)
    kx, ky, kp, kx2, ky2, kx3, ky3 = jax.random.split(key, 7)

    x = jax.random.normal(kx, (batch, n_states), jnp.float32)
    y = jax.random.normal(ky, (batch, n_actions), jnp.float32)
    params = init_params(kp, n_states, n_actions, n_hidden)
    ref = reference_forward(x, y, params)

    # f32 weight path (exact epilogue; final layer is a VPU mul+reduce so the
    # accumulation order differs slightly from the reference matmul).
    packed_f32 = pack_params(params, jnp.float32)
    out = jax.block_until_ready(ddpg_critic_forward(x, y, packed_f32))
    assert out.shape == (batch, 1), out.shape
    assert jnp.allclose(out, ref, atol=5e-3, rtol=5e-3), (out, ref)

    # bf16 weight path (default; MXU fast path on all chips), f32 accumulation.
    packed_bf16 = pack_params(params)
    out_bf16 = jax.block_until_ready(ddpg_critic_forward(x, y, packed_bf16))
    assert out_bf16.shape == (batch, 1), out_bf16.shape
    assert jnp.allclose(out_bf16, ref, atol=5e-2, rtol=5e-2), (out_bf16, ref)

    # Larger batch: exercises grid > 1 with two balanced full tiles (tb=160).
    B2 = 320
    x2 = jax.random.normal(kx2, (B2, n_states), jnp.float32)
    y2 = jax.random.normal(ky2, (B2, n_actions), jnp.float32)
    ref2 = reference_forward(x2, y2, params)
    out2 = jax.block_until_ready(ddpg_critic_forward(x2, y2, packed_f32))
    assert out2.shape == (B2, 1), out2.shape
    assert jnp.allclose(out2, ref2, atol=5e-3, rtol=5e-3)

    # Odd batch: exercises a partial last tile (tb=64, grid=2, 36 valid rows).
    B3 = 100
    x3 = jax.random.normal(kx3, (B3, n_states), jnp.float32)
    y3 = jax.random.normal(ky3, (B3, n_actions), jnp.float32)
    ref3 = reference_forward(x3, y3, params)
    out3 = jax.block_until_ready(ddpg_critic_forward(x3, y3, packed_bf16))
    assert out3.shape == (B3, 1), out3.shape
    assert jnp.allclose(out3, ref3, atol=5e-2, rtol=5e-2)

    print("KERNEL_OK")
</pallas_src>

<mosaic_0001>
module attributes {stable_mosaic.version = 11 : i64} {
  func.func @_critic_kernel(%arg0: i32, %arg1: memref<16x24xf32, #tpu.memory_space<vmem>>, %arg2: memref<24x32xf32, #tpu.memory_space<vmem>>, %arg3: memref<32x32xf32, #tpu.memory_space<vmem>>, %arg4: memref<32x32xf32, #tpu.memory_space<vmem>>, %arg5: memref<1x32xf32, #tpu.memory_space<vmem>>, %arg6: memref<4x32xf32, #tpu.memory_space<vmem>>, %arg7: memref<16x1xf32, #tpu.memory_space<vmem>>) attributes {dimension_semantics = [#tpu.dimension_semantics<parallel>], iteration_bounds = array<i64: 1>, scalar_prefetch = 0 : i64, scratch_operands = 0 : i64, tpu.core_type = #tpu.core_type<tc>, window_params = [{transform_indices = @transform_0, window_bounds = array<i64: 16, 24>}, {pipeline_mode = #tpu.pipeline_mode<synchronous>, transform_indices = @transform_1, window_bounds = array<i64: 24, 32>}, {pipeline_mode = #tpu.pipeline_mode<synchronous>, transform_indices = @transform_2, window_bounds = array<i64: 32, 32>}, {pipeline_mode = #tpu.pipeline_mode<synchronous>, transform_indices = @transform_3, window_bounds = array<i64: 32, 32>}, {pipeline_mode = #tpu.pipeline_mode<synchronous>, transform_indices = @transform_4, window_bounds = array<i64: 1, 32>}, {pipeline_mode = #tpu.pipeline_mode<synchronous>, transform_indices = @transform_5, window_bounds = array<i64: 4, 32>}, {transform_indices = @transform_6, window_bounds = array<i64: 16, 1>}]} {
    %c0 = arith.constant 0 : index
    %c0_0 = arith.constant 0 : index
    %0 = vector.load %arg1[%c0, %c0_0] : memref<16x24xf32, #tpu.memory_space<vmem>>, vector<16x24xf32>
    %c0_1 = arith.constant 0 : index
    %c0_2 = arith.constant 0 : index
    %1 = vector.load %arg2[%c0_1, %c0_2] : memref<24x32xf32, #tpu.memory_space<vmem>>, vector<24x32xf32>
    %cst = arith.constant dense<0.000000e+00> : vector<16x32xf32>
    %2 = tpu.matmul %0, %1, %cst {dimension_numbers = #tpu.dot_dimension_numbers<[1], [0], [0], [1], [0, 0, 1, 1], [], []>} : vector<16x24xf32>, vector<24x32xf32>, vector<16x32xf32> -> vector<16x32xf32>
    %c0_3 = arith.constant 0 : index
    %c0_4 = arith.constant 0 : index
    %3 = vector.load %arg6[%c0_3, %c0_4] : memref<4x32xf32, #tpu.memory_space<vmem>>, vector<1x32xf32>
    %4 = vector.broadcast %3 : vector<1x32xf32> to vector<16x32xf32>
    %5 = arith.addf %2, %4 : vector<16x32xf32>
    %c0_5 = arith.constant 0 : index
    %c0_6 = arith.constant 0 : index
    %6 = vector.load %arg3[%c0_5, %c0_6] : memref<32x32xf32, #tpu.memory_space<vmem>>, vector<32x32xf32>
    %cst_7 = arith.constant dense<0.000000e+00> : vector<16x32xf32>
    %7 = tpu.matmul %5, %6, %cst_7 {dimension_numbers = #tpu.dot_dimension_numbers<[1], [0], [0], [1], [0, 0, 1, 1], [], []>} : vector<16x32xf32>, vector<32x32xf32>, vector<16x32xf32> -> vector<16x32xf32>
    %c1 = arith.constant 1 : index
    %c0_8 = arith.constant 0 : index
    %8 = vector.load %arg6[%c1, %c0_8] : memref<4x32xf32, #tpu.memory_space<vmem>>, vector<1x32xf32>
    %9 = vector.broadcast %8 : vector<1x32xf32> to vector<16x32xf32>
    %10 = arith.addf %7, %9 : vector<16x32xf32>
    %cst_9 = arith.constant 0.000000e+00 : f32
    %11 = vector.broadcast %cst_9 : f32 to vector<16x32xf32>
    %12 = arith.maximumf %10, %11 : vector<16x32xf32>
    %c0_10 = arith.constant 0 : index
    %c0_11 = arith.constant 0 : index
    %13 = vector.load %arg4[%c0_10, %c0_11] : memref<32x32xf32, #tpu.memory_space<vmem>>, vector<32x32xf32>
    %cst_12 = arith.constant dense<0.000000e+00> : vector<16x32xf32>
    %14 = tpu.matmul %12, %13, %cst_12 {dimension_numbers = #tpu.dot_dimension_numbers<[1], [0], [0], [1], [0, 0, 1, 1], [], []>} : vector<16x32xf32>, vector<32x32xf32>, vector<16x32xf32> -> vector<16x32xf32>
    %c2 = arith.constant 2 : index
    %c0_13 = arith.constant 0 : index
    %15 = vector.load %arg6[%c2, %c0_13] : memref<4x32xf32, #tpu.memory_space<vmem>>, vector<1x32xf32>
    %16 = vector.broadcast %15 : vector<1x32xf32> to vector<16x32xf32>
    %17 = arith.addf %14, %16 : vector<16x32xf32>
    %cst_14 = arith.constant 0.000000e+00 : f32
    %18 = vector.broadcast %cst_14 : f32 to vector<16x32xf32>
    %19 = arith.maximumf %17, %18 : vector<16x32xf32>
    %c0_15 = arith.constant 0 : index
    %c0_16 = arith.constant 0 : index
    %20 = vector.load %arg5[%c0_15, %c0_16] : memref<1x32xf32, #tpu.memory_space<vmem>>, vector<1x32xf32>
    %21 = vector.broadcast %20 : vector<1x32xf32> to vector<16x32xf32>
    %22 = arith.mulf %19, %21 : vector<16x32xf32>
    %cst_17 = arith.constant dense<0.000000e+00> : vector<16xf32>
    %23 = vector.multi_reduction <add>, %22, %cst_17 [1] : vector<16x32xf32> to vector<16xf32>
    %24 = vector.shape_cast %23 : vector<16xf32> to vector<16x1xf32>
    %c3 = arith.constant 3 : index
    %c0_18 = arith.constant 0 : index
    %25 = vector.load %arg6[%c3, %c0_18] : memref<4x32xf32, #tpu.memory_space<vmem>>, vector<1x1xf32>
    %26 = vector.broadcast %25 : vector<1x1xf32> to vector<16x1xf32>
    %27 = arith.addf %24, %26 : vector<16x1xf32>
    %c0_19 = arith.constant 0 : index
    %c0_20 = arith.constant 0 : index
    %28 = vector.load %arg7[%c0_19, %c0_20] : memref<16x1xf32, #tpu.memory_space<vmem>>, vector<16x1xf32>
    tpu.vector_store %arg7[%c0_19, %c0_20], %27 {strides = array<i32>} : memref<16x1xf32, #tpu.memory_space<vmem>>, vector<16x1xf32>,
    return
  }
  func.func @transform_0(%arg0: i32) -> (i32, i32) {
    %c0_i32 = arith.constant 0 : i32
    %c0_i32_0 = arith.constant 0 : i32
    return %arg0, %c0_i32 : i32, i32
  }
  func.func @transform_1(%arg0: i32) -> (i32, i32) {
    %c0_i32 = arith.constant 0 : i32
    %c0_i32_0 = arith.constant 0 : i32
    %c0_i32_1 = arith.constant 0 : i32
    return %c0_i32, %c0_i32_0 : i32, i32
  }
  func.func @transform_2(%arg0: i32) -> (i32, i32) {
    %c0_i32 = arith.constant 0 : i32
    %c0_i32_0 = arith.constant 0 : i32
    %c0_i32_1 = arith.constant 0 : i32
    return %c0_i32, %c0_i32_0 : i32, i32
  }
  func.func @transform_3(%arg0: i32) -> (i32, i32) {
    %c0_i32 = arith.constant 0 : i32
    %c0_i32_0 = arith.constant 0 : i32
    %c0_i32_1 = arith.constant 0 : i32
    return %c0_i32, %c0_i32_0 : i32, i32
  }
  func.func @transform_4(%arg0: i32) -> (i32, i32) {
    %c0_i32 = arith.constant 0 : i32
    %c0_i32_0 = arith.constant 0 : i32
    %c0_i32_1 = arith.constant 0 : i32
    return %c0_i32, %c0_i32_0 : i32, i32
  }
  func.func @transform_5(%arg0: i32) -> (i32, i32) {
    %c0_i32 = arith.constant 0 : i32
    %c0_i32_0 = arith.constant 0 : i32
    %c0_i32_1 = arith.constant 0 : i32
    return %c0_i32, %c0_i32_0 : i32, i32
  }
  func.func @transform_6(%arg0: i32) -> (i32, i32) {
    %c0_i32 = arith.constant 0 : i32
    %c0_i32_0 = arith.constant 0 : i32
    return %arg0, %c0_i32 : i32, i32
  }
}

</mosaic_0001>

<llo_original>
// kernel: ddpg_critic_forward.1
$region0: #{ddpg_critic_forward.1}
  #allocation0 [shape = 'u32[]', space=smem, size = 0x4, offset = 0x4, fixed_abs, tag = 'smem constant byte address 0x4 - core index']
  #allocation1 [shape = 'u32[144,128]{1,0:T(1,128)}', space=vmem, size = 0x12000, scoped, tag = 'internal scratch']
  %s0 = inlined_call_operand.vmem [shape: f32[2,24], index: 0, kind: input, shape index: {}]
  %s1 = inlined_call_operand.hbm [shape: f32[24,32], index: 1, kind: input, shape index: {}]
  %s2 = inlined_call_operand.hbm [shape: f32[32,32], index: 2, kind: input, shape index: {}]
  %s3 = inlined_call_operand.hbm [shape: f32[32,32], index: 3, kind: input, shape index: {}]
  %s4 = inlined_call_operand.vmem [shape: f32[1,32], index: 4, kind: input, shape index: {}]
  %s5 = inlined_call_operand.vmem [shape: f32[4,32], index: 5, kind: input, shape index: {}]
  %s6 = inlined_call_operand.vmem [shape: f32[2,1], index: 6, kind: output, shape index: {}]
  %s7 = sld [smem:[#allocation0]]
  $region76: #{ddpg_critic_forward.1} parent=0
    _
  %s9 = ssub.s32 1, %s7
  %s10 = scalar_select 0, %s9, %s7
  $region1: #{ddpg_critic_forward.1} parent=0
    #allocation2 [shape = 'u8[12288]{0}', space=vmem, size = 0x3000, scoped, tag = 'input window, operand 1, single buffered']
    #allocation3 [shape = 's32[1]{0}', space=sflag, size = 0x4, scoped, tag = 'scoped memory for ddpg_critic_forward.1']
    #allocation4 [shape = 'u8[16384]{0}', space=vmem, size = 0x4000, scoped, tag = 'input window, operand 2, single buffered']
    #allocation5 [shape = 's32[1]{0}', space=sflag, size = 0x4, scoped, tag = 'scoped memory for ddpg_critic_forward.1']
    #allocation6 [shape = 'u8[16384]{0}', space=vmem, size = 0x4000, scoped, tag = 'input window, operand 3, single buffered']
    #allocation7 [shape = 'u8[8192]{0}', space=vmem, size = 0x2000, scoped, tag = 'output window, operand 0, single buffered']
    %11 = vsyncpa [#allocation3], 0
    %12 = vsyncpa [#allocation5], 0
    // Predicated region
    $region2: #{ddpg_critic_forward.1} parent=1 // pred_check
      _
    $region3: #{ddpg_critic_forward.1} parent=1 // pred_check_branch
      %14 = sbr.rel (0) target = $region5
    $region4: #{ddpg_critic_forward.1} parent=1 // pred_region
      _
    $region5: #{ddpg_critic_forward.1} parent=1 // pred_fallthru
      _
    // Predicated region
    $region6: #{ddpg_critic_forward.1} parent=1 // pred_check
      _
    $region7: #{ddpg_critic_forward.1} parent=1 // pred_check_branch
      %16 = sbr.rel (0) target = $region9
    $region8: #{ddpg_critic_forward.1} parent=1 // pred_region
      %s18 = ssub.s32 384, 384
      %19 = vsyncadd [#allocation3], %s18
      %s20 = sshll.u32 [#allocation2], 4
      %s21 = int_to_ptr.vmem [resolvable:$true] %s20
      %26 = dma.hbm_to_vmem [thread:$0]  %s1, 384, %s21, [#allocation3], 128, 128, 8
    $region9: #{ddpg_critic_forward.1} parent=1 // pred_fallthru
      _
    // Predicated region
    $region10: #{ddpg_critic_forward.1} parent=1 // pred_check
      _
    $region11: #{ddpg_critic_forward.1} parent=1 // pred_check_branch
      %28 = sbr.rel (0) target = $region13
    $region12: #{ddpg_critic_forward.1} parent=1 // pred_region
      %s30 = ssub.s32 512, 512
      %31 = vsyncadd [#allocation5], %s30
      %s32 = sshll.u32 [#allocation4], 4
      %s33 = int_to_ptr.vmem [resolvable:$true] %s32
      %38 = dma.hbm_to_vmem [thread:$0]  %s2, 512, %s33, [#allocation5], 128, 128, 8
    $region13: #{ddpg_critic_forward.1} parent=1 // pred_fallthru
      _
    // Predicated region
    $region14: #{ddpg_critic_forward.1} parent=1 // pred_check
      _
    $region15: #{ddpg_critic_forward.1} parent=1 // pred_check_branch
      %40 = sbr.rel (0) target = $region17
    $region16: #{ddpg_critic_forward.1} parent=1 // pred_region
      %s42 = ssub.s32 512, 512
      %43 = vsyncadd [#allocation5], %s42
      %s44 = sshll.u32 [#allocation6], 4
      %s45 = int_to_ptr.vmem [resolvable:$true] %s44
      %50 = dma.hbm_to_vmem [thread:$0]  %s3, 512, %s45, [#allocation5], 128, 128, 8
    $region17: #{ddpg_critic_forward.1} parent=1 // pred_fallthru
      _
    // Predicated region
    $region18: #{ddpg_critic_forward.1} parent=1 // pred_check
      _
    $region19: #{ddpg_critic_forward.1} parent=1 // pred_check_branch
      %52 = sbr.rel (0) target = $region21
    $region20: #{ddpg_critic_forward.1} parent=1 // pred_region
      _
    $region21: #{ddpg_critic_forward.1} parent=1 // pred_fallthru
      _
    // Predicated region
    $region22: #{ddpg_critic_forward.1} parent=1 // pred_check
      _
    $region23: #{ddpg_critic_forward.1} parent=1 // pred_check_branch
      %54 = sbr.rel (0) target = $region25
    $region24: #{ddpg_critic_forward.1} parent=1 // pred_region
      _
    $region25: #{ddpg_critic_forward.1} parent=1 // pred_fallthru
      _
    // Predicated region
    $region26: #{ddpg_critic_forward.1} parent=1 // pred_check
      _
    $region27: #{ddpg_critic_forward.1} parent=1 // pred_check_branch
      %56 = sbr.rel (0) target = $region29
    $region28: #{ddpg_critic_forward.1} parent=1 // pred_region
      %57 = dma.done [#allocation3], 384
    $region29: #{ddpg_critic_forward.1} parent=1 // pred_fallthru
      _
    // Predicated region
    $region30: #{ddpg_critic_forward.1} parent=1 // pred_check
      _
    $region31: #{ddpg_critic_forward.1} parent=1 // pred_check_branch
      %59 = sbr.rel (0) target = $region33
    $region32: #{ddpg_critic_forward.1} parent=1 // pred_region
      %60 = dma.done [#allocation5], 512
    $region33: #{ddpg_critic_forward.1} parent=1 // pred_fallthru
      _
    // Predicated region
    $region34: #{ddpg_critic_forward.1} parent=1 // pred_check
      _
    $region35: #{ddpg_critic_forward.1} parent=1 // pred_check_branch
      %62 = sbr.rel (0) target = $region37
    $region36: #{ddpg_critic_forward.1} parent=1 // pred_region
      %63 = dma.done [#allocation5], 512
    $region37: #{ddpg_critic_forward.1} parent=1 // pred_fallthru
      _
    %v64 = vld [vmem:[%s0] sm:$0xff]
    %v65 = vld [vmem:[%s0 + $0x8] sm:$0xff]
    %v66 = vld [vmem:[#allocation2] sm:$0xff]
    %v67 = vld [vmem:[#allocation2 + $0x8] sm:$0xff]
    %v68 = vld [vmem:[#allocation2 + $0x10] sm:$0xff]
    %v69 = vld [vmem:[%s5] sm:$0x1]
    %v70 = vlaneseq
    %v71 = vshrl.u32 %v70, 7
    %v72 = vsub.s32 0, %v71
    %v73 = vrot.slane %v69, %v72
    %vm74 = vcmask 195584
    %v76 = vsel %vm74, %v64, 0
    %v79 = vsel %vm74, %v65, 0
    %81 = vmatprep.subr.mxu0 0.0
    %82 = vmatpush1.msra.mxu0 0.0
    %83 = vmatprep.subr.mxu0 0.0
    %84 = vmatpush1.msra.mxu0 0.0
    %85 = vmatprep.subr.mxu0 0.0
    %86 = vmatpush1.msra.mxu0 0.0
    %87 = vmatprep.subr.mxu0 0.0
    %88 = vmatpush1.msra.mxu0 0.0
    %89 = vmatprep.subr.mxu0 0.0
    %90 = vmatpush1.msra.mxu0 0.0
    %91 = vmatprep.subr.mxu0 0.0
    %92 = vmatpush1.msra.mxu0 0.0
    %93 = vmatprep.subr.mxu0 0.0
    %94 = vmatpush1.msra.mxu0 0.0
    %95 = vmatprep.subr.mxu0 0.0
    %96 = vmatpush1.msra.mxu0 0.0
    %97 = vmatprep.subr.mxu0 0.0
    %98 = vmatpush1.msra.mxu0 0.0
    %99 = vmatprep.subr.mxu0 0.0
    %100 = vmatpush1.msra.mxu0 0.0
    %101 = vmatprep.subr.mxu0 0.0
    %102 = vmatpush1.msra.mxu0 0.0
    %103 = vmatprep.subr.mxu0 0.0
    %104 = vmatpush1.msra.mxu0 0.0
    %105 = vmatprep.subr.mxu0 0.0
    %106 = vmatpush1.msra.mxu0 0.0
    %107 = vmatprep.subr.mxu0 0.0
    %108 = vmatpush1.msra.mxu0 %v68
    %109 = vmatprep.subr.mxu0 0.0
    %110 = vmatpush1.msra.mxu0 %v67
    %111 = vmatprep.subr.mxu0 0.0
    %112 = vmatpush1.msra.mxu0 %v66
    %113 = vmatprep.subr.mxu0 0.0
    %114 = vmatpush2.msra.mxu0 0.0
    %115 = vmatprep.subr.mxu0 0.0
    %116 = vmatpush2.msra.mxu0 0.0
    %117 = vmatprep.subr.mxu0 0.0
    %118 = vmatpush2.msra.mxu0 0.0
    %119 = vmatprep.subr.mxu0 0.0
    %120 = vmatpush2.msra.mxu0 0.0
    %121 = vmatprep.subr.mxu0 0.0
    %122 = vmatpush2.msra.mxu0 0.0
    %123 = vmatprep.subr.mxu0 0.0
    %124 = vmatpush2.msra.mxu0 0.0
    %125 = vmatprep.subr.mxu0 0.0
    %126 = vmatpush2.msra.mxu0 0.0
    %127 = vmatprep.subr.mxu0 0.0
    %128 = vmatpush2.msra.mxu0 0.0
    %129 = vmatprep.subr.mxu0 0.0
    %130 = vmatpush2.msra.mxu0 0.0
    %131 = vmatprep.subr.mxu0 0.0
    %132 = vmatpush2.msra.mxu0 0.0
    %133 = vmatprep.subr.mxu0 0.0
    %134 = vmatpush2.msra.mxu0 0.0
    %135 = vmatprep.subr.mxu0 0.0
    %136 = vmatpush2.msra.mxu0 0.0
    %137 = vmatprep.subr.mxu0 0.0
    %138 = vmatpush2.msra.mxu0 0.0
    %139 = vmatprep.subr.mxu0 0.0
    %140 = vmatpush2.msra.mxu0 0.0
    %141 = vmatprep.subr.mxu0 0.0
    %142 = vmatpush2.msra.mxu0 0.0
    %143 = vmatprep.subr.mxu0 0.0
    %144 = vmatpush2.msra.mxu0 0.0
    %145 = vmatprep.mubr.f32.mxu0 0.0
    %146 = vmatmul.mubr.f32.gmra.mxu0 %v76
    %v147 = vpop.f32.mrf.mxu0
    %v148 = vadd.f32 %v73, %v147
    %v149 = vpop.f32.mrf.mxu0
    %150 = vmatprep.mubr.f32.mxu0 0.0
    %151 = vmatmul.mubr.f32.gmra.mxu0 %v79
    %v152 = vpop.f32.mrf.mxu0
    %v153 = vadd.f32 %v73, %v152
    %v154 = vpop.f32.mrf.mxu0
    %155 = vdwg.mxu0
    %v156 = vld [vmem:[#allocation4] sm:$0xff]
    %v157 = vld [vmem:[#allocation4 + $0x8] sm:$0xff]
    %v158 = vld [vmem:[#allocation4 + $0x10] sm:$0xff]
    %v159 = vld [vmem:[#allocation4 + $0x18] sm:$0xff]
    %v160 = vld [vmem:[%s5 + $0x1] sm:$0x1]
    %v161 = vlaneseq
    %v162 = vshrl.u32 %v161, 7
    %v163 = vsub.s32 0, %v162
    %v164 = vrot.slane %v160, %v163
    %vm165 = vcmask 261120
    %v167 = vsel %vm165, %v148, 0
    %v170 = vsel %vm165, %v153, 0
    %172 = vmatprep.subr.mxu0 0.0
    %173 = vmatpush1.msra.mxu0 0.0
    %174 = vmatprep.subr.mxu0 0.0
    %175 = vmatpush1.msra.mxu0 0.0
    %176 = vmatprep.subr.mxu0 0.0
    %177 = vmatpush1.msra.mxu0 0.0
    %178 = vmatprep.subr.mxu0 0.0
    %179 = vmatpush1.msra.mxu0 0.0
    %180 = vmatprep.subr.mxu0 0.0
    %181 = vmatpush1.msra.mxu0 0.0
    %182 = vmatprep.subr.mxu0 0.0
    %183 = vmatpush1.msra.mxu0 0.0
    %184 = vmatprep.subr.mxu0 0.0
    %185 = vmatpush1.msra.mxu0 0.0
    %186 = vmatprep.subr.mxu0 0.0
    %187 = vmatpush1.msra.mxu0 0.0
    %188 = vmatprep.subr.mxu0 0.0
    %189 = vmatpush1.msra.mxu0 0.0
    %190 = vmatprep.subr.mxu0 0.0
    %191 = vmatpush1.msra.mxu0 0.0
    %192 = vmatprep.subr.mxu0 0.0
    %193 = vmatpush1.msra.mxu0 0.0
    %194 = vmatprep.subr.mxu0 0.0
    %195 = vmatpush1.msra.mxu0 0.0
    %196 = vmatprep.subr.mxu0 0.0
    %197 = vmatpush1.msra.mxu0 %v159
    %198 = vmatprep.subr.mxu0 0.0
    %199 = vmatpush1.msra.mxu0 %v158
    %200 = vmatprep.subr.mxu0 0.0
    %201 = vmatpush1.msra.mxu0 %v157
    %202 = vmatprep.subr.mxu0 0.0
    %203 = vmatpush1.msra.mxu0 %v156
    %204 = vmatprep.subr.mxu0 0.0
    %205 = vmatpush2.msra.mxu0 0.0
    %206 = vmatprep.subr.mxu0 0.0
    %207 = vmatpush2.msra.mxu0 0.0
    %208 = vmatprep.subr.mxu0 0.0
    %209 = vmatpush2.msra.mxu0 0.0
    %210 = vmatprep.subr.mxu0 0.0
    %211 = vmatpush2.msra.mxu0 0.0
    %212 = vmatprep.subr.mxu0 0.0
    %213 = vmatpush2.msra.mxu0 0.0
    %214 = vmatprep.subr.mxu0 0.0
    %215 = vmatpush2.msra.mxu0 0.0
    %216 = vmatprep.subr.mxu0 0.0
    %217 = vmatpush2.msra.mxu0 0.0
    %218 = vmatprep.subr.mxu0 0.0
    %219 = vmatpush2.msra.mxu0 0.0
    %220 = vmatprep.subr.mxu0 0.0
    %221 = vmatpush2.msra.mxu0 0.0
    %222 = vmatprep.subr.mxu0 0.0
    %223 = vmatpush2.msra.mxu0 0.0
    %224 = vmatprep.subr.mxu0 0.0
    %225 = vmatpush2.msra.mxu0 0.0
    %226 = vmatprep.subr.mxu0 0.0
    %227 = vmatpush2.msra.mxu0 0.0
    %228 = vmatprep.subr.mxu0 0.0
    %229 = vmatpush2.msra.mxu0 0.0
    %230 = vmatprep.subr.mxu0 0.0
    %231 = vmatpush2.msra.mxu0 0.0
    %232 = vmatprep.subr.mxu0 0.0
    %233 = vmatpush2.msra.mxu0 0.0
    %234 = vmatprep.subr.mxu0 0.0
    %235 = vmatpush2.msra.mxu0 0.0
    %236 = vmatprep.mubr.f32.mxu0 0.0
    %237 = vmatmul.mubr.f32.gmra.mxu0 %v167
    %v238 = vpop.f32.mrf.mxu0
    %v239 = vadd.f32 %v164, %v238
    %v240 = vpop.f32.mrf.mxu0
    %241 = vmatprep.mubr.f32.mxu0 0.0
    %242 = vmatmul.mubr.f32.gmra.mxu0 %v170
    %v243 = vpop.f32.mrf.mxu0
    %v244 = vadd.f32 %v164, %v243
    %v245 = vpop.f32.mrf.mxu0
    %246 = vdwg.mxu0
    %v247 = vmax.f32 %v239, 0.0
    %v248 = vmax.f32 %v244, 0.0
    %v249 = vld [vmem:[#allocation6] sm:$0xff]
    %v250 = vld [vmem:[#allocation6 + $0x8] sm:$0xff]
    %v251 = vld [vmem:[#allocation6 + $0x10] sm:$0xff]
    %v252 = vld [vmem:[#allocation6 + $0x18] sm:$0xff]
    %v253 = vld [vmem:[%s5 + $0x2] sm:$0x1]
    %v254 = vlaneseq
    %v255 = vshrl.u32 %v254, 7
    %v256 = vsub.s32 0, %v255
    %v257 = vrot.slane %v253, %v256
    %v259 = vsel %vm165, %v247, 0
    %v262 = vsel %vm165, %v248, 0
    %264 = vmatprep.subr.mxu0 0.0
    %265 = vmatpush1.msra.mxu0 0.0
    %266 = vmatprep.subr.mxu0 0.0
    %267 = vmatpush1.msra.mxu0 0.0
    %268 = vmatprep.subr.mxu0 0.0
    %269 = vmatpush1.msra.mxu0 0.0
    %270 = vmatprep.subr.mxu0 0.0
    %271 = vmatpush1.msra.mxu0 0.0
    %272 = vmatprep.subr.mxu0 0.0
    %273 = vmatpush1.msra.mxu0 0.0
    %274 = vmatprep.subr.mxu0 0.0
    %275 = vmatpush1.msra.mxu0 0.0
    %276 = vmatprep.subr.mxu0 0.0
    %277 = vmatpush1.msra.mxu0 0.0
    %278 = vmatprep.subr.mxu0 0.0
    %279 = vmatpush1.msra.mxu0 0.0
    %280 = vmatprep.subr.mxu0 0.0
    %281 = vmatpush1.msra.mxu0 0.0
    %282 = vmatprep.subr.mxu0 0.0
    %283 = vmatpush1.msra.mxu0 0.0
    %284 = vmatprep.subr.mxu0 0.0
    %285 = vmatpush1.msra.mxu0 0.0
    %286 = vmatprep.subr.mxu0 0.0
    %287 = vmatpush1.msra.mxu0 0.0
    %288 = vmatprep.subr.mxu0 0.0
    %289 = vmatpush1.msra.mxu0 %v252
    %290 = vmatprep.subr.mxu0 0.0
    %291 = vmatpush1.msra.mxu0 %v251
    %292 = vmatprep.subr.mxu0 0.0
    %293 = vmatpush1.msra.mxu0 %v250
    %294 = vmatprep.subr.mxu0 0.0
    %295 = vmatpush1.msra.mxu0 %v249
    %296 = vmatprep.subr.mxu0 0.0
    %297 = vmatpush2.msra.mxu0 0.0
    %298 = vmatprep.subr.mxu0 0.0
    %299 = vmatpush2.msra.mxu0 0.0
    %300 = vmatprep.subr.mxu0 0.0
    %301 = vmatpush2.msra.mxu0 0.0
    %302 = vmatprep.subr.mxu0 0.0
    %303 = vmatpush2.msra.mxu0 0.0
    %304 = vmatprep.subr.mxu0 0.0
    %305 = vmatpush2.msra.mxu0 0.0
    %306 = vmatprep.subr.mxu0 0.0
    %307 = vmatpush2.msra.mxu0 0.0
    %308 = vmatprep.subr.mxu0 0.0
    %309 = vmatpush2.msra.mxu0 0.0
    %310 = vmatprep.subr.mxu0 0.0
    %311 = vmatpush2.msra.mxu0 0.0
    %312 = vmatprep.subr.mxu0 0.0
    %313 = vmatpush2.msra.mxu0 0.0
    %314 = vmatprep.subr.mxu0 0.0
    %315 = vmatpush2.msra.mxu0 0.0
    %316 = vmatprep.subr.mxu0 0.0
    %317 = vmatpush2.msra.mxu0 0.0
    %318 = vmatprep.subr.mxu0 0.0
    %319 = vmatpush2.msra.mxu0 0.0
    %320 = vmatprep.subr.mxu0 0.0
    %321 = vmatpush2.msra.mxu0 0.0
    %322 = vmatprep.subr.mxu0 0.0
    %323 = vmatpush2.msra.mxu0 0.0
    %324 = vmatprep.subr.mxu0 0.0
    %325 = vmatpush2.msra.mxu0 0.0
    %326 = vmatprep.subr.mxu0 0.0
    %327 = vmatpush2.msra.mxu0 0.0
    %328 = vmatprep.mubr.f32.mxu0 0.0
    %329 = vmatmul.mubr.f32.gmra.mxu0 %v259
    %v330 = vpop.f32.mrf.mxu0
    %v331 = vadd.f32 %v257, %v330
    %v332 = vpop.f32.mrf.mxu0
    %333 = vmatprep.mubr.f32.mxu0 0.0
    %334 = vmatmul.mubr.f32.gmra.mxu0 %v262
    %v335 = vpop.f32.mrf.mxu0
    %v336 = vadd.f32 %v257, %v335
    %v337 = vpop.f32.mrf.mxu0
    %338 = vdwg.mxu0
    %v339 = vmax.f32 %v331, 0.0
    %v340 = vmax.f32 %v336, 0.0
    %v341 = vld [vmem:[%s4] sm:$0x1]
    %v343 = vlaneseq
    %v344 = vshrl.u32 %v343, 7
    %v345 = vsub.s32 0, %v344
    %v346 = vrot.slane %v341, %v345
    %v348 = vmul.f32 %v339, %v346
    %v349 = vmul.f32 %v340, %v346
    %v350 = vsel %vm165, %v348, 0.0
    %351 = vadd.xlane.f32.xlu0 %v350
    %v352 = vpop.xlane.xlu0 %351
    %v353 = vsel %vm165, %v349, 0.0
    %354 = vadd.xlane.f32.xlu0 %v353
    %v355 = vpop.xlane.xlu0 %354
    %v356 = vld [vmem:[%s5 + $0x3] sm:$0x1]
    %v357 = vlaneseq
    %v358 = vshrl.u32 %v357, 7
    %v359 = vsub.s32 0, %v358
    %v360 = vrot.slane %v356, %v359
    %v361 = vadd.f32 %v352, %v360
    %v362 = vadd.f32 %v355, %v360
    %vm363 = vcmask 7168
    %364 = vst.msk [vmem:[#allocation7] sm:$0xff] %vm363, %v361
    %365 = vst.msk [vmem:[#allocation7 + $0x8] sm:$0xff] %vm363, %v362
    // Predicated region
    $region38: #{ddpg_critic_forward.1} parent=1 // pred_check
      _
    $region39: #{ddpg_critic_forward.1} parent=1 // pred_check_branch
      %367 = sbr.rel (0) target = $region41
    $region40: #{ddpg_critic_forward.1} parent=1 // pred_region
      // Predicated region
      $region42: #{ddpg_critic_forward.1} parent=40 // pred_check
        _
      $region43: #{ddpg_critic_forward.1} parent=40 // pred_check_branch
        %369 = sbr.rel (0) target = $region45
      $region44: #{ddpg_critic_forward.1} parent=40 // pred_region
        // Predicated region
        $region46: #{ddpg_critic_forward.1} parent=44 // pred_check
          _
        $region47: #{ddpg_critic_forward.1} parent=44 // pred_check_branch
          %371 = sbr.rel target = $region49
        $region48: #{ddpg_critic_forward.1} parent=44 // pred_region
          // Predicated region
          $region61: #{ddpg_critic_forward.1} parent=48 // pred_check
            _
          $region62: #{ddpg_critic_forward.1} parent=48 // pred_check_branch
            %387 = sbr.rel (0) target = $region64
          $region63: #{ddpg_critic_forward.1} parent=48 // pred_region
            %s389 = ssub.s32 4, 1
            loop: start=0, step=1, limit=1
            $region65: #{ddpg_critic_forward.1} parent=63 // loop_pre_header
              _
            $region66: #{ddpg_critic_forward.1} parent=63 // loop_header
              %s391 = sphi 0, %s395
              %p392 = scmp.ge.s32.totalorder %s391, 1
              %s396 = sphi [#allocation7], [#allocation7]
              %s397 = sphi %s6, %s6
            $region67: #{ddpg_critic_forward.1} parent=63 // loop_header_branch
              %394 = sbr.rel (%p392) target = $region71
            $region68: #{ddpg_critic_forward.1} parent=63 // loop_body
              %v398 = vld [vmem:[%s396] sm:%s389]
              %399 = vst [vmem:[%s397] sm:%s389] %v398
            $region69: #{ddpg_critic_forward.1} parent=63 // loop_footer
              %s395 = sadd.s32 1, %s391
            $region70: #{ddpg_critic_forward.1} parent=63 // loop_footer_branch
              %390 = sbr.rel target = $region66
            $region71: #{ddpg_critic_forward.1} parent=63 // loop_exit
              _
          $region64: #{ddpg_critic_forward.1} parent=48 // pred_fallthru
            _
        $region49: #{ddpg_critic_forward.1} parent=44 // pred_fallthru
          _
        // Predicated region
        $region50: #{ddpg_critic_forward.1} parent=44 // pred_check
          _
        $region51: #{ddpg_critic_forward.1} parent=44 // pred_check_branch
          %373 = sbr.rel (0) target = $region53
        $region52: #{ddpg_critic_forward.1} parent=44 // pred_region
          %s375 = ssub.s32 4, 1
          loop: start=0, step=1, limit=1
          $region54: #{ddpg_critic_forward.1} parent=52 // loop_pre_header
            _
          $region55: #{ddpg_critic_forward.1} parent=52 // loop_header
            %s377 = sphi 0, %s381
            %p378 = scmp.ge.s32.totalorder %s377, 1
            %s382 = sphi [#allocation7], [#allocation7]
            %s383 = sphi %s6, %s6
          $region56: #{ddpg_critic_forward.1} parent=52 // loop_header_branch
            %380 = sbr.rel (%p378) target = $region60
          $region57: #{ddpg_critic_forward.1} parent=52 // loop_body
            %v384 = vld [vmem:[%s382] sm:%s375]
            %385 = vst [vmem:[%s383] sm:%s375] %v384
          $region58: #{ddpg_critic_forward.1} parent=52 // loop_footer
            %s381 = sadd.s32 1, %s377
          $region59: #{ddpg_critic_forward.1} parent=52 // loop_footer_branch
            %376 = sbr.rel target = $region55
          $region60: #{ddpg_critic_forward.1} parent=52 // loop_exit
            _
        $region53: #{ddpg_critic_forward.1} parent=44 // pred_fallthru
          _
      $region45: #{ddpg_critic_forward.1} parent=40 // pred_fallthru
        _
      %400 = vnop
    $region41: #{ddpg_critic_forward.1} parent=1 // pred_fallthru
      _
    // Predicated region
    $region72: #{ddpg_critic_forward.1} parent=1 // pred_check
      _
    $region73: #{ddpg_critic_forward.1} parent=1 // pred_check_branch
      %402 = sbr.rel (0) target = $region75
    $region74: #{ddpg_critic_forward.1} parent=1 // pred_region
      _
    $region75: #{ddpg_critic_forward.1} parent=1 // pred_fallthru
      _
    %403 = vsyncpa [#allocation3], 1
    %404 = vsyncpa [#allocation5], 1

</llo_original>
